<compile_context>
chip_gen: v5e
topology: v5e:2x2
jax: 0.10.0
libtpu: 0.0.40
codegen_flags: <defaults>
</compile_context>

<pallas_src>
import jax
import jax.numpy as jnp
from jax import lax
from jax.experimental import pallas as pl
from jax.experimental.pallas import tpu as pltpu


def _band_add_kernel(off_ref, prompt_ref, x_ref, o_ref):
    # off_ref: (1,) int32 in SMEM (band start in row-block units); only the
    # index_maps use it.  prompt block (1, C, RB, W) broadcasts over the
    # batch-tile axis of the x block (bt, C, RB, W).  One wide VPU add.
    del off_ref
    o_ref[...] = x_ref[...] + prompt_ref[...]


def _largest_divisor_at_most(n, cap):
    cap = max(1, min(n, cap))
    for d in range(cap, 0, -1):
        if n % d == 0:
            return d
    return 1


def random_patch_prompt(x, patch, offsets, *, vmem_block_budget=24 * 1024 * 1024):
    """x: (B, C, H, W); patch: (1, C, P, P); offsets: (2,) int32 -> (B, C, H, W).

    Exact for offsets in [0, H - P]; the PyTorch module draws them from
    [0, H - P - 1].  Out-of-range offsets are clamped (dynamic_update_slice
    semantics) instead of raising like the PyTorch slice-assign.
    """
    B, C, H, W = x.shape
    P = patch.shape[-1]
    rx, ry = offsets[0], offsets[1]
    itemsize = jnp.dtype(x.dtype).itemsize

    # Row-block granularity: 8 rows (one f32 sublane group).  If H is not a
    # multiple of 8, fall back to a single whole-image row block (a block dim
    # equal to the full array dim is always layout-legal).
    RB = 8 if H % 8 == 0 else H
    n_row_blocks = H // RB
    # RB-row blocks needed to cover [rx, rx + P) for any rx, clipped to image.
    nb = min(-(-(P + RB - 1) // RB), n_row_blocks)
    band_rows = nb * RB

    # Band start in row-block units, shifted so the band stays in-bounds.
    band_start_blk = jnp.clip(rx // RB, 0, n_row_blocks - nb).astype(jnp.int32)

    # Hoisted offset-dependent work (depends on (rx, ry), not on b): build the
    # band-height prompt once with the patch placed inside it.
    prompt_band = jnp.zeros((1, C, band_rows, W), x.dtype)
    row_in_band = rx - band_start_blk * RB
    prompt_band = lax.dynamic_update_slice(
        prompt_band, patch.astype(x.dtype), (0, 0, row_in_band, ry))

    # VMEM-aware batch tile: 2 (double buffer) x 2 (x, out) blocks plus the
    # small streamed prompt block must fit the budget.  Always divides B.
    block_row_bytes = C * RB * W * itemsize
    cap = max(1, vmem_block_budget // max(1, 4 * block_row_bytes))
    batch_tile = _largest_divisor_at_most(B, cap)
    grid = (B // batch_tile, nb)

    bytes_accessed = itemsize * (2 * B * C * band_rows * W + C * band_rows * W)

    out = pl.pallas_call(
        _band_add_kernel,
        out_shape=jax.ShapeDtypeStruct((B, C, H, W), x.dtype),
        grid_spec=pltpu.PrefetchScalarGridSpec(
            num_scalar_prefetch=1,
            grid=grid,
            in_specs=[
                # prompt band: one RB-row slab per row step, broadcast over batch.
                pl.BlockSpec((1, C, RB, W), lambda b, j, off: (0, 0, j, 0)),
                # x: data-dependent row-block index = band start + j.
                pl.BlockSpec((batch_tile, C, RB, W),
                             lambda b, j, off: (b, 0, off[0] + j, 0)),
            ],
            out_specs=pl.BlockSpec((batch_tile, C, RB, W),
                                   lambda b, j, off: (b, 0, off[0] + j, 0)),
        ),
        # Output aliases x: rows outside the band are never read or written.
        input_output_aliases={2: 0},
        compiler_params=pltpu.CompilerParams(
            dimension_semantics=("parallel", "arbitrary"),
            vmem_limit_bytes=32 * 1024 * 1024,
        ),
        cost_estimate=pl.CostEstimate(
            flops=B * C * band_rows * W,
            transcendentals=0,
            bytes_accessed=bytes_accessed,
        ),
    )(band_start_blk.reshape(1), prompt_band, x)
    return out


if __name__ == "__main__":
    image_size = 32   # H % 8 == 0 and band (16 rows) < H: exercises the
    prompt_size = 4   # untouched-rows-preserved-by-aliasing path.
    batch = 2
    channels = 3

    key = jax.random.PRNGKey(0)
    k_x, k_patch, k_off = jax.random.split(key, 3)

    # Inputs / deterministic parameter init (mirrors torch.randn([1,3,P,P])).
    x = jax.random.normal(k_x, (batch, channels, image_size, image_size),
                          dtype=jnp.float32)
    patch = jax.random.normal(k_patch, (1, channels, prompt_size, prompt_size),
                              dtype=jnp.float32)

    # np.random.randint(0, image_size - prompt_size) equivalent (exclusive hi).
    rx = jax.random.randint(k_off, (), 0, image_size - prompt_size,
                            dtype=jnp.int32)
    ry = jax.random.randint(jax.random.fold_in(k_off, 1), (), 0,
                            image_size - prompt_size, dtype=jnp.int32)
    offsets = jnp.stack([rx, ry]).astype(jnp.int32)

    out = random_patch_prompt(x, patch, offsets)
    out = jax.block_until_ready(out)

    # Pure-JAX reference of the PyTorch forward.
    prompt_ref = jnp.zeros((1, channels, image_size, image_size), jnp.float32)
    prompt_ref = lax.dynamic_update_slice(prompt_ref, patch, (0, 0, rx, ry))
    ref = x + prompt_ref

    assert out.shape == x.shape and out.dtype == x.dtype
    assert jnp.allclose(out, ref, atol=1e-5, rtol=1e-5)
    print("KERNEL_OK")
</pallas_src>

<mosaic_0001>
module attributes {stable_mosaic.version = 11 : i64} {
  func.func @_band_add_kernel(%arg0: i32, %arg1: i32, %arg2: memref<1xi32, #tpu.memory_space<smem>>, %arg3: memref<1x3x8x32xf32, #tpu.memory_space<vmem>>, %arg4: memref<2x3x8x32xf32, #tpu.memory_space<vmem>>, %arg5: memref<2x3x8x32xf32, #tpu.memory_space<vmem>>) attributes {dimension_semantics = [#tpu.dimension_semantics<parallel>, #tpu.dimension_semantics<arbitrary>], iteration_bounds = array<i64: 1, 2>, scalar_prefetch = 1 : i64, scratch_operands = 0 : i64, tpu.core_type = #tpu.core_type<tc>, window_params = [{transform_indices = @transform_0, window_bounds = array<i64: 1, 3, 8, 32>}, {transform_indices = @transform_1, window_bounds = array<i64: 2, 3, 8, 32>}, {transform_indices = @transform_2, window_bounds = array<i64: 2, 3, 8, 32>}]} {
    %c0 = arith.constant 0 : index
    %c0_0 = arith.constant 0 : index
    %c0_1 = arith.constant 0 : index
    %c0_2 = arith.constant 0 : index
    %0 = vector.load %arg4[%c0, %c0_0, %c0_1, %c0_2] : memref<2x3x8x32xf32, #tpu.memory_space<vmem>>, vector<2x3x8x32xf32>
    %c0_3 = arith.constant 0 : index
    %c0_4 = arith.constant 0 : index
    %c0_5 = arith.constant 0 : index
    %c0_6 = arith.constant 0 : index
    %1 = vector.load %arg3[%c0_3, %c0_4, %c0_5, %c0_6] : memref<1x3x8x32xf32, #tpu.memory_space<vmem>>, vector<1x3x8x32xf32>
    %2 = vector.broadcast %1 : vector<1x3x8x32xf32> to vector<2x3x8x32xf32>
    %3 = arith.addf %0, %2 : vector<2x3x8x32xf32>
    %c0_7 = arith.constant 0 : index
    %c0_8 = arith.constant 0 : index
    %c0_9 = arith.constant 0 : index
    %c0_10 = arith.constant 0 : index
    %4 = vector.load %arg5[%c0_7, %c0_8, %c0_9, %c0_10] : memref<2x3x8x32xf32, #tpu.memory_space<vmem>>, vector<2x3x8x32xf32>
    tpu.vector_store %arg5[%c0_7, %c0_8, %c0_9, %c0_10], %3 {strides = array<i32>} : memref<2x3x8x32xf32, #tpu.memory_space<vmem>>, vector<2x3x8x32xf32>,
    return
  }
  func.func @transform_0(%arg0: i32, %arg1: i32, %arg2: memref<1xi32, #tpu.memory_space<smem>>) -> (i32, i32, i32, i32) {
    %c0_i32 = arith.constant 0 : i32
    %c0_i32_0 = arith.constant 0 : i32
    %c0_i32_1 = arith.constant 0 : i32
    %c0_i32_2 = arith.constant 0 : i32
    return %c0_i32, %c0_i32_0, %arg1, %c0_i32_1 : i32, i32, i32, i32
  }
  func.func @transform_1(%arg0: i32, %arg1: i32, %arg2: memref<1xi32, #tpu.memory_space<smem>>) -> (i32, i32, i32, i32) {
    %c0 = arith.constant 0 : index
    %0 = memref.load %arg2[%c0] : memref<1xi32, #tpu.memory_space<smem>>
    %1 = arith.addi %0, %arg1 : i32
    %c0_i32 = arith.constant 0 : i32
    %c0_i32_0 = arith.constant 0 : i32
    %c0_i32_1 = arith.constant 0 : i32
    return %arg0, %c0_i32, %1, %c0_i32_0 : i32, i32, i32, i32
  }
  func.func @transform_2(%arg0: i32, %arg1: i32, %arg2: memref<1xi32, #tpu.memory_space<smem>>) -> (i32, i32, i32, i32) {
    %c0 = arith.constant 0 : index
    %0 = memref.load %arg2[%c0] : memref<1xi32, #tpu.memory_space<smem>>
    %1 = arith.addi %0, %arg1 : i32
    %c0_i32 = arith.constant 0 : i32
    %c0_i32_0 = arith.constant 0 : i32
    %c0_i32_1 = arith.constant 0 : i32
    return %arg0, %c0_i32, %1, %c0_i32_0 : i32, i32, i32, i32
  }
}

</mosaic_0001>

<llo_original>
// kernel: tpu_custom_call.1
$region0: #{tpu_custom_call.1}
  #allocation0 [shape = 'u32[]', space=smem, size = 0x4, offset = 0x4, fixed_abs, tag = 'smem constant byte address 0x4 - core index']
  #allocation1 [shape = 'u32[72,128]{1,0:T(1,128)}', space=vmem, size = 0x9000, scoped, tag = 'internal scratch']
  #allocation2 [shape = 's32[1]{0}', space=sflag, size = 0x4, scoped, tag = 'scoped memory for tpu_custom_call.1']
  #allocation3 [shape = 's32[1]{0:T(128)S(6)}', space=smem, size = 0x200, scoped, tag = 'prefetched SMEM operand 0']
  %s0 = inlined_call_operand.<no memory space> [shape: s32[1], index: 0, kind: input, shape index: {}]
  %s1 = inlined_call_operand.vmem [shape: f32[1,3,16,32], index: 1, kind: input, shape index: {}]
  %s2 = inlined_call_operand.hbm [shape: f32[2,3,32,32], index: 2, kind: input, shape index: {}, may-alias: {2,3}]
  %s3 = inlined_call_operand.hbm [shape: f32[2,3,32,32], index: 3, kind: output, shape index: {}, may-alias: {2,3}]
  %s4 = sld [smem:[#allocation0]]
  $region83: #{tpu_custom_call.1} parent=0
    _
  %s6 = ssub.s32 1, %s4
  %s7 = scalar_select 0, %s6, %s4
  %8 = sst [smem:[#allocation3]] %s0
  $region1: #{tpu_custom_call.1} parent=0
    #allocation4 [shape = 'u8[24576]{0}', space=vmem, size = 0x6000, scoped, tag = 'input window, operand 1']
    #allocation5 [shape = 'u8[49152]{0}', space=vmem, size = 0xc000, scoped, tag = 'input window, operand 2']
    #allocation6 [shape = 's32[2]{0}', space=sflag, size = 0x8, scoped, tag = 'scoped memory for tpu_custom_call.1']
    #allocation7 [shape = 's32[2]{0}', space=sflag, size = 0x8, scoped, tag = 'scoped memory for tpu_custom_call.1']
    #allocation8 [shape = 'u8[49152]{0}', space=vmem, size = 0xc000, scoped, tag = 'output window, operand 0']
    %9 = vsyncpa [#allocation6], 0
    %s10 = scalar_lea.sflag [#allocation6], 1
    %11 = vsyncpa %s10, 0
    %12 = vsyncpa [#allocation7], 0
    %s13 = scalar_lea.sflag [#allocation7], 1
    %14 = vsyncpa %s13, 0
    loop: start=0, step=1, limit=4
    $region2: #{tpu_custom_call.1} parent=1 // loop_pre_header
      _
    $region3: #{tpu_custom_call.1} parent=1 // loop_header
      %s16 = sphi 0, %s20
      %p17 = scmp.ge.s32.totalorder %s16, 4
      %s23 = sphi 0, %s35
      %s24 = sphi 0, %s31
      %s25 = sphi 0, %s23
      %s26 = sphi 0, %s24
      %s27 = sphi 0, %s25
      %s28 = sphi 0, %s26
      %s38 = sphi 0, %s40
      %s41 = sphi 0, %s38
      %s42 = sphi 0, %s41
      %s58 = sphi 0, %s42
      %s70 = sphi 0, %s72
      %s73 = sphi 0, %s70
      %s74 = sphi 0, %s73
      %s90 = sphi 0, %s74
      %s102 = sphi 0, %s104
      %s105 = sphi 0, %s102
      %s106 = sphi 0, %s105
      %s122 = sphi 0, %s106
    $region4: #{tpu_custom_call.1} parent=1 // loop_header_branch
      %19 = sbr.rel (%p17) target = $region8
    $region5: #{tpu_custom_call.1} parent=1 // loop_body
      %s21 = ssub.s32 %s16, 1
      %s22 = ssub.s32 %s16, 2
      %s29 = sadd.s32 1, %s24
      %p30 = scmp.ge.s32.totalorder %s29, 2
      %s31 = scalar_select %p30, 0, %s29
      %s32 = sadd.s32 1, %s23
      %s33 = scalar_select %p30, %s32, %s23
      %p34 = scmp.ge.s32.totalorder %s33, 1
      %s35 = scalar_select %p34, 0, %s33
      %s36 = ssub.s32 %s24, %s31
      %p37 = scmp.eq.s32.totalorder %s36, 0
      %s39 = sadd.s32 %s38, 1
      %s40 = scalar_select %p37, %s38, %s39
      %p43 = pneg %p37
      %p44 = scmp.eq.s32.totalorder %s16, 1
      %p45 = por %p43, %p44
      %p46 = scmp.ne.s32.totalorder %s38, %s41
      %p47 = scmp.eq.s32.totalorder %s16, 0
      %p48 = por %p46, %p47
      %p49 = scmp.ne.s32.totalorder %s38, %s41
      %p50 = scmp.eq.s32.totalorder %s21, 1
      %p51 = por %p49, %p50
      %p52 = scmp.ne.s32.totalorder %s41, %s42
      %p53 = scmp.eq.s32.totalorder %s21, 0
      %p54 = por %p52, %p53
      %p55 = scmp.ne.s32.totalorder %s41, %s42
      %p56 = scmp.eq.s32.totalorder %s22, 1
      %p57 = por %p55, %p56
      %p59 = scmp.ne.s32.totalorder %s42, %s58
      %p60 = scmp.eq.s32.totalorder %s22, 0
      %p61 = por %p59, %p60
      %s62 = sld [smem:[#allocation3]]
      %s63 = sadd.s32 %s62, %s24
      %s64 = sld [smem:[#allocation3]]
      %s65 = sadd.s32 %s64, %s31
      %s66 = ssub.s32 %s23, %s35
      %s67 = ssub.s32 %s63, %s65
      %s68 = sor.u32 %s66, %s67
      %p69 = scmp.eq.s32.totalorder %s68, 0
      %s71 = sadd.s32 %s70, 1
      %s72 = scalar_select %p69, %s70, %s71
      %p75 = pneg %p69
      %p76 = scmp.eq.s32.totalorder %s16, 1
      %p77 = por %p75, %p76
      %p78 = scmp.ne.s32.totalorder %s70, %s73
      %p79 = scmp.eq.s32.totalorder %s16, 0
      %p80 = por %p78, %p79
      %p81 = scmp.ne.s32.totalorder %s70, %s73
      %p82 = scmp.eq.s32.totalorder %s21, 1
      %p83 = por %p81, %p82
      %p84 = scmp.ne.s32.totalorder %s73, %s74
      %p85 = scmp.eq.s32.totalorder %s21, 0
      %p86 = por %p84, %p85
      %p87 = scmp.ne.s32.totalorder %s73, %s74
      %p88 = scmp.eq.s32.totalorder %s22, 1
      %p89 = por %p87, %p88
      %p91 = scmp.ne.s32.totalorder %s74, %s90
      %p92 = scmp.eq.s32.totalorder %s22, 0
      %p93 = por %p91, %p92
      %s94 = sld [smem:[#allocation3]]
      %s95 = sadd.s32 %s94, %s24
      %s96 = sld [smem:[#allocation3]]
      %s97 = sadd.s32 %s96, %s31
      %s98 = ssub.s32 %s23, %s35
      %s99 = ssub.s32 %s95, %s97
      %s100 = sor.u32 %s98, %s99
      %p101 = scmp.eq.s32.totalorder %s100, 0
      %s103 = sadd.s32 %s102, 1
      %s104 = scalar_select %p101, %s102, %s103
      %p107 = pneg %p101
      %p108 = scmp.eq.s32.totalorder %s16, 1
      %p109 = por %p107, %p108
      %p110 = scmp.ne.s32.totalorder %s102, %s105
      %p111 = scmp.eq.s32.totalorder %s16, 0
      %p112 = por %p110, %p111
      %p113 = scmp.ne.s32.totalorder %s102, %s105
      %p114 = scmp.eq.s32.totalorder %s21, 1
      %p115 = por %p113, %p114
      %p116 = scmp.ne.s32.totalorder %s105, %s106
      %p117 = scmp.eq.s32.totalorder %s21, 0
      %p118 = por %p116, %p117
      %p119 = scmp.ne.s32.totalorder %s105, %s106
      %p120 = scmp.eq.s32.totalorder %s22, 1
      %p121 = por %p119, %p120
      %p123 = scmp.ne.s32.totalorder %s106, %s122
      %p124 = scmp.eq.s32.totalorder %s22, 0
      %p125 = por %p123, %p124
      %p126 = scmp.le.s32.totalorder 1, %s16
      %p127 = scmp.lt.s32.totalorder %s16, 3
      %p128 = pnand %p126, %p127
      %p129 = pneg %p128
      // Predicated region
      $region9: #{tpu_custom_call.1} parent=5 // pred_check
        _
      $region10: #{tpu_custom_call.1} parent=5 // pred_check_branch
        %131 = sbr.rel (%p128) target = $region12
      $region11: #{tpu_custom_call.1} parent=5 // pred_region
        %s132 = ssub.s32 %s16, 1
      $region12: #{tpu_custom_call.1} parent=5 // pred_fallthru
        _
      %p133 = scmp.lt.s32.totalorder %s16, 2
      // Predicated region
      $region13: #{tpu_custom_call.1} parent=5 // pred_check
        %p134 = pneg %p133
      $region14: #{tpu_custom_call.1} parent=5 // pred_check_branch
        %136 = sbr.rel (%p134) target = $region16
      $region15: #{tpu_custom_call.1} parent=5 // pred_region
        // Predicated region
        $region17: #{tpu_custom_call.1} parent=15 // pred_check
          %p137 = pneg %p48
        $region18: #{tpu_custom_call.1} parent=15 // pred_check_branch
          %139 = sbr.rel (%p137) target = $region20
        $region19: #{tpu_custom_call.1} parent=15 // pred_region
          %s140 = sand.u32 %s38, 1
          %s141 = sand.u32 %s38, 1
          %s142 = smul.addr %s141, 24
          %s143 = scalar_lea.vmem [#allocation4], %s142
          %s144 = smul.addr %s24, 8
          %s145 = scalar_lea.vmem %s1, %s144
          // Predicated region
          $region21: #{tpu_custom_call.1} parent=19 // pred_check
            _
          $region22: #{tpu_custom_call.1} parent=19 // pred_check_branch
            %147 = sbr.rel (0) target = $region24
          $region23: #{tpu_custom_call.1} parent=19 // pred_region
            // Predicated region
            $region25: #{tpu_custom_call.1} parent=23 // pred_check
              _
            $region26: #{tpu_custom_call.1} parent=23 // pred_check_branch
              %149 = sbr.rel (0) target = $region28
            $region27: #{tpu_custom_call.1} parent=23 // pred_region
              // Predicated region
              $region40: #{tpu_custom_call.1} parent=27 // pred_check
                _
              $region41: #{tpu_custom_call.1} parent=27 // pred_check_branch
                %169 = sbr.rel (0) target = $region43
              $region42: #{tpu_custom_call.1} parent=27 // pred_region
                loop: start=0, step=1, limit=1
                $region44: #{tpu_custom_call.1} parent=42 // loop_pre_header
                  _
                $region45: #{tpu_custom_call.1} parent=42 // loop_header
                  %s171 = sphi 0, %s175
                  %p172 = scmp.ge.s32.totalorder %s171, 1
                  %s176 = sphi %s145, %s145
                  %s177 = sphi %s143, %s143
                $region46: #{tpu_custom_call.1} parent=42 // loop_header_branch
                  %174 = sbr.rel (%p172) target = $region50
                $region47: #{tpu_custom_call.1} parent=42 // loop_body
                  %v178 = vld [vmem:[%s176] sm:$0xff]
                  %179 = vst [vmem:[%s177] sm:$0xff] %v178
                  %v180 = vld [vmem:[%s176 + $0x10] sm:$0xff]
                  %181 = vst [vmem:[%s177 + $0x8] sm:$0xff] %v180
                  %v182 = vld [vmem:[%s176 + $0x20] sm:$0xff]
                  %183 = vst [vmem:[%s177 + $0x10] sm:$0xff] %v182
                $region48: #{tpu_custom_call.1} parent=42 // loop_footer
                  %s175 = sadd.s32 1, %s171
                $region49: #{tpu_custom_call.1} parent=42 // loop_footer_branch
                  %170 = sbr.rel target = $region45
                $region50: #{tpu_custom_call.1} parent=42 // loop_exit
                  _
              $region43: #{tpu_custom_call.1} parent=27 // pred_fallthru
                _
              // Predicated region
              $region51: #{tpu_custom_call.1} parent=27 // pred_check
                _
              $region52: #{tpu_custom_call.1} parent=27 // pred_check_branch
                %185 = sbr.rel target = $region54
              $region53: #{tpu_custom_call.1} parent=27 // pred_region
                _
              $region54: #{tpu_custom_call.1} parent=27 // pred_fallthru
                _
            $region28: #{tpu_custom_call.1} parent=23 // pred_fallthru
              _
            // Predicated region
            $region29: #{tpu_custom_call.1} parent=23 // pred_check
              _
            $region30: #{tpu_custom_call.1} parent=23 // pred_check_branch
              %151 = sbr.rel target = $region32
            $region31: #{tpu_custom_call.1} parent=23 // pred_region
              %s153 = ssub.s32 256, 1
              loop: start=0, step=1, limit=1
              $region33: #{tpu_custom_call.1} parent=31 // loop_pre_header
                _
              $region34: #{tpu_custom_call.1} parent=31 // loop_header
                %s155 = sphi 0, %s159
                %p156 = scmp.ge.s32.totalorder %s155, 1
                %s160 = sphi %s145, %s145
                %s161 = sphi %s143, %s143
              $region35: #{tpu_custom_call.1} parent=31 // loop_header_branch
                %158 = sbr.rel (%p156) target = $region39
              $region36: #{tpu_custom_call.1} parent=31 // loop_body
                %v162 = vld [vmem:[%s160] sm:%s153]
                %163 = vst [vmem:[%s161] sm:%s153] %v162
                %v164 = vld [vmem:[%s160 + $0x10] sm:%s153]
                %165 = vst [vmem:[%s161 + $0x8] sm:%s153] %v164
                %v166 = vld [vmem:[%s160 + $0x20] sm:%s153]
                %167 = vst [vmem:[%s161 + $0x10] sm:%s153] %v166
              $region37: #{tpu_custom_call.1} parent=31 // loop_footer
                %s159 = sadd.s32 1, %s155
              $region38: #{tpu_custom_call.1} parent=31 // loop_footer_branch
                %154 = sbr.rel target = $region34
              $region39: #{tpu_custom_call.1} parent=31 // loop_exit
                _
            $region32: #{tpu_custom_call.1} parent=23 // pred_fallthru
              _
          $region24: #{tpu_custom_call.1} parent=19 // pred_fallthru
            _
          %186 = vnop
        $region20: #{tpu_custom_call.1} parent=15 // pred_fallthru
          _
        // Predicated region
        $region55: #{tpu_custom_call.1} parent=15 // pred_check
          %p187 = pneg %p80
        $region56: #{tpu_custom_call.1} parent=15 // pred_check_branch
          %189 = sbr.rel (%p187) target = $region58
        $region57: #{tpu_custom_call.1} parent=15 // pred_region
          %s190 = sand.u32 %s70, 1
          %s191 = scalar_lea.sflag [#allocation6], %s190
          %s192 = sand.u32 %s70, 1
          %s193 = smul.addr %s192, 48
          %s194 = scalar_lea.vmem [#allocation5], %s193
          %s195 = sld [smem:[#allocation3]]
          %s196 = sadd.s32 %s195, %s24
          %s197 = smul.u32 2, %s23
          %199 = vsyncadd %s191, 0
          %s200 = smul.addr %s197, 12
          %s201 = sadd.s32 %s196, %s200
          %s202 = smul.addr %s201, 8
          %s203 = scalar_lea.hbm %s2, %s202
          %s204 = sshll.u32 %s203, 4
          %s205 = int_to_ptr.hbm [resolvable:$true] %s204
          %s206 = sshll.u32 %s194, 4
          %s207 = int_to_ptr.vmem [resolvable:$true] %s206
          %212 = dma.hbm_to_vmem [thread:$0]  %s205, 768, %s207, %s191, 512, 128, 8
        $region58: #{tpu_custom_call.1} parent=15 // pred_fallthru
          _
      $region16: #{tpu_custom_call.1} parent=5 // pred_fallthru
        _
      %p213 = scmp.le.s32.totalorder 1, %s16
      %p214 = scmp.lt.s32.totalorder %s16, 3
      %p215 = pnand %p213, %p214
      %p216 = pneg %p215
      // Predicated region
      $region59: #{tpu_custom_call.1} parent=5 // pred_check
        _
      $region60: #{tpu_custom_call.1} parent=5 // pred_check_branch
        %218 = sbr.rel (%p215) target = $region62
      $region61: #{tpu_custom_call.1} parent=5 // pred_region
        %s219 = ssub.s32 %s16, 1
        %s220 = sand.u32 %s41, 1
        %s221 = sand.u32 %s41, 1
        %s222 = smul.addr %s221, 24
        %s223 = scalar_lea.vmem [#allocation4], %s222
        // Predicated region
        $region63: #{tpu_custom_call.1} parent=61 // pred_check
          %p224 = pneg %p54
        $region64: #{tpu_custom_call.1} parent=61 // pred_check_branch
          %226 = sbr.rel (%p224) target = $region66
        $region65: #{tpu_custom_call.1} parent=61 // pred_region
          _
        $region66: #{tpu_custom_call.1} parent=61 // pred_fallthru
          _
        %s227 = sand.u32 %s73, 1
        %s228 = scalar_lea.sflag [#allocation6], %s227
        %s229 = sand.u32 %s73, 1
        %s230 = smul.addr %s229, 48
        %s231 = scalar_lea.vmem [#allocation5], %s230
        // Predicated region
        $region67: #{tpu_custom_call.1} parent=61 // pred_check
          %p232 = pneg %p86
        $region68: #{tpu_custom_call.1} parent=61 // pred_check_branch
          %234 = sbr.rel (%p232) target = $region70
        $region69: #{tpu_custom_call.1} parent=61 // pred_region
          %236 = dma.done %s228, 768
        $region70: #{tpu_custom_call.1} parent=61 // pred_fallthru
          _
        %s237 = sand.u32 %s41, 1
        %s238 = sand.u32 %s41, 1
        %s239 = smul.addr %s238, 24
        %s240 = scalar_lea.vmem [#allocation4], %s239
        %p241 = pneg %p54
        %p242 = pneg %p51
        %s243 = sand.u32 %s73, 1
        %s244 = scalar_lea.sflag [#allocation6], %s243
        %s245 = sand.u32 %s73, 1
        %s246 = smul.addr %s245, 48
        %s247 = scalar_lea.vmem [#allocation5], %s246
        %p248 = pneg %p86
        %p249 = pneg %p83
        %p250 = pneg %p118
        %p251 = pneg %p115
        %s252 = sand.u32 %s105, 1
        %s253 = scalar_lea.sflag [#allocation7], %s252
        %s254 = sand.u32 %s105, 1
        %s255 = smul.addr %s254, 48
        %s256 = scalar_lea.vmem [#allocation8], %s255
        %s257 = sld [smem:[#allocation3]]
        %s258 = sadd.s32 %s257, %s26
        %s259 = smul.u32 2, %s25
        %s260 = sld [smem:[#allocation3]]
        %s261 = sadd.s32 %s260, %s26
        %s262 = smul.u32 2, %s25
        %v263 = vld [vmem:[%s231] sm:$0xff]
        %v264 = vld [vmem:[%s231 + $0x8] sm:$0xff]
        %v265 = vld [vmem:[%s231 + $0x10] sm:$0xff]
        %v266 = vld [vmem:[%s231 + $0x18] sm:$0xff]
        %v267 = vld [vmem:[%s231 + $0x20] sm:$0xff]
        %v268 = vld [vmem:[%s231 + $0x28] sm:$0xff]
        %v269 = vld [vmem:[%s223] sm:$0xff]
        %v270 = vld [vmem:[%s223 + $0x8] sm:$0xff]
        %v271 = vld [vmem:[%s223 + $0x10] sm:$0xff]
        %v272 = vadd.f32 %v263, %v269
        %v273 = vadd.f32 %v264, %v270
        %v274 = vadd.f32 %v265, %v271
        %v275 = vadd.f32 %v266, %v269
        %v276 = vadd.f32 %v267, %v270
        %v277 = vadd.f32 %v268, %v271
        %vm278 = vcmask 261120
        %279 = vst.msk [vmem:[%s256] sm:$0xff] %vm278, %v272
        %280 = vst.msk [vmem:[%s256 + $0x8] sm:$0xff] %vm278, %v273
        %281 = vst.msk [vmem:[%s256 + $0x10] sm:$0xff] %vm278, %v274
        %282 = vst.msk [vmem:[%s256 + $0x18] sm:$0xff] %vm278, %v275
        %283 = vst.msk [vmem:[%s256 + $0x20] sm:$0xff] %vm278, %v276
        %284 = vst.msk [vmem:[%s256 + $0x28] sm:$0xff] %vm278, %v277
        %s285 = sand.u32 %s105, 1
        %s286 = scalar_lea.sflag [#allocation7], %s285
        %s287 = sand.u32 %s105, 1
        %s288 = smul.addr %s287, 48
        %s289 = scalar_lea.vmem [#allocation8], %s288
        // Predicated region
        $region71: #{tpu_custom_call.1} parent=61 // pred_check
          %p290 = pneg %p115
        $region72: #{tpu_custom_call.1} parent=61 // pred_check_branch
          %292 = sbr.rel (%p290) target = $region74
        $region73: #{tpu_custom_call.1} parent=61 // pred_region
          %s293 = sld [smem:[#allocation3]]
          %s294 = sadd.s32 %s293, %s26
          %s295 = smul.u32 2, %s25
          %297 = vsyncadd %s286, 0
          %s298 = smul.addr %s295, 12
          %s299 = sadd.s32 %s294, %s298
          %s300 = smul.addr %s299, 8
          %s301 = scalar_lea.hbm %s3, %s300
          %s302 = sshll.u32 %s289, 4
          %s303 = int_to_ptr.vmem [resolvable:$true] %s302
          %s304 = sshll.u32 %s301, 4
          %s305 = int_to_ptr.hbm [resolvable:$true] %s304
          %310 = dma.vmem_to_hbm [thread:$0]  %s303, 768, %s305, %s286, 128, 512, 8
        $region74: #{tpu_custom_call.1} parent=61 // pred_fallthru
          _
      $region62: #{tpu_custom_call.1} parent=5 // pred_fallthru
        _
      %p311 = scmp.le.s32.totalorder 2, %s16
      // Predicated region
      $region75: #{tpu_custom_call.1} parent=5 // pred_check
        %p312 = pneg %p311
      $region76: #{tpu_custom_call.1} parent=5 // pred_check_branch
        %314 = sbr.rel (%p312) target = $region78
      $region77: #{tpu_custom_call.1} parent=5 // pred_region
        %s315 = ssub.s32 %s16, 2
        // Predicated region
        $region79: #{tpu_custom_call.1} parent=77 // pred_check
          %p316 = pneg %p121
        $region80: #{tpu_custom_call.1} parent=77 // pred_check_branch
          %318 = sbr.rel (%p316) target = $region82
        $region81: #{tpu_custom_call.1} parent=77 // pred_region
          %s319 = sand.u32 %s106, 1
          %s320 = scalar_lea.sflag [#allocation7], %s319
          %s321 = sand.u32 %s106, 1
          %s322 = smul.addr %s321, 48
          %s323 = scalar_lea.vmem [#allocation8], %s322
          %325 = dma.done %s320, 768
        $region82: #{tpu_custom_call.1} parent=77 // pred_fallthru
          _
      $region78: #{tpu_custom_call.1} parent=5 // pred_fallthru
        _
    $region6: #{tpu_custom_call.1} parent=1 // loop_footer
      %s20 = sadd.s32 1, %s16
    $region7: #{tpu_custom_call.1} parent=1 // loop_footer_branch
      %15 = sbr.rel target = $region3
    $region8: #{tpu_custom_call.1} parent=1 // loop_exit
      _
    %326 = vsyncpa [#allocation6], 1
    %s327 = scalar_lea.sflag [#allocation6], 1
    %328 = vsyncpa %s327, 1
    %329 = vsyncpa [#allocation7], 1
    %s330 = scalar_lea.sflag [#allocation7], 1
    %331 = vsyncpa %s330, 1

</llo_original>
